<compile_context>
chip_gen: v5e
topology: v5e:2x2
jax: 0.10.0
libtpu: 0.0.40
codegen_flags: <defaults>
</compile_context>

<pallas_src>
import functools

import jax
import jax.numpy as jnp
from jax.experimental import pallas as pl
from jax.experimental.pallas import tpu as pltpu


def same_block_kernel(x_ref, w_ref, p_ref, o_ref, xp_ref, col_ref, *, W, KH, KW, pad):
    """One batch element per grid step, lane-dense (channels x flattened-spatial) layout.

    x_ref:   (1, Cin, H*W)            input, flattened spatial (unpadded)
    w_ref:   (Cout, KH*KW*Cin)        conv weights, K axis ordered (kh, kw, ci)
    p_ref:   (3, Cout, 1)             packed [bias, gamma, beta]
    o_ref:   (1, Cout, H*W)           output
    xp_ref:  (Cin, H*W + 2*L)  VMEM   zero-haloed flat staging buffer, L = pad*(W+1)
    col_ref: (KH*KW*Cin, H*W)  VMEM   im2col matrix
    """
    Cin = x_ref.shape[1]
    HW = x_ref.shape[2]
    L = pad * (W + 1)

    # Stage the input into a zero-haloed flat buffer: implements the conv's zero padding
    # in-kernel (halo handles H-edge overflow of the flat shifts; W-edge handled by masks).
    xp_ref[...] = jnp.zeros_like(xp_ref)
    xp_ref[:, L:L + HW] = x_ref[0]

    # Column coordinate of each lane, for masking W-edge wraparound of the flat shifts.
    w_pos = jax.lax.broadcasted_iota(jnp.int32, (Cin, HW), 1) % W

    # ---- im2col in VMEM: KH*KW shifted (and W-edge-masked) views of the staged input ----
    for kh in range(KH):
        for kw in range(KW):
            dh, dw = kh - pad, kw - pad
            s = dh * W + dw                          # flat shift of this tap
            tap = xp_ref[:, L + s:L + s + HW]        # (Cin, HW); H-edge zeros from the halo
            if dw != 0:
                tap = jnp.where((w_pos + dw >= 0) & (w_pos + dw < W), tap, 0.0)
            t = kh * KW + kw
            col_ref[t * Cin:(t + 1) * Cin, :] = tap

    # ---- Conv as a single MXU contraction: (Cout, K) @ (K, HW), K = KH*KW*Cin ----
    acc = jnp.dot(w_ref[...], col_ref[...], preferred_element_type=jnp.float32)
    acc = acc + p_ref[0]                             # conv bias, (Cout, 1) broadcast

    # ---- InstanceNorm2d: per-channel stats over H*W, single pass (lane reductions) ----
    inv_n = 1.0 / HW
    mean = jnp.sum(acc, axis=1, keepdims=True) * inv_n
    mean_sq = jnp.sum(acc * acc, axis=1, keepdims=True) * inv_n
    var = jnp.maximum(mean_sq - mean * mean, 0.0)    # biased variance, clamped for safety
    scale = p_ref[1] * jax.lax.rsqrt(var + 1e-5)     # gamma / sqrt(var + eps)
    shift = p_ref[2] - mean * scale                  # beta - mean * scale

    # ---- affine + ReLU, lane-dense store ----
    o_ref[0] = jnp.maximum(acc * scale + shift, 0.0).astype(o_ref.dtype)


def same_block2d(x_nchw, w_hwio, bias, gamma, beta, *, padding=1):
    """x_nchw: (N, Cin, H, W); w_hwio: (KH, KW, Cin, Cout). Returns (N, Cout, H, W)."""
    N, Cin, H, W = x_nchw.shape
    KH, KW, _, Cout = w_hwio.shape
    pad = padding
    assert KH == KW and KH == 2 * pad + 1, "SameBlock2d expects a 'same' conv (k == 2p+1)"

    HW = H * W
    L = pad * (W + 1)

    # Wrapper does only free contiguous reshapes -- no transpose / pad HBM round trips.
    x_flat = x_nchw.reshape(N, Cin, HW)
    # (KH, KW, Cin, Cout) -> (Cout, KH*KW*Cin), matching the kernel's im2col row order.
    w2 = jnp.transpose(w_hwio, (3, 0, 1, 2)).reshape(Cout, KH * KW * Cin)
    params = jnp.stack([bias, gamma, beta]).reshape(3, Cout, 1)

    kernel = functools.partial(same_block_kernel, W=W, KH=KH, KW=KW, pad=pad)

    out_flat = pl.pallas_call(
        kernel,
        out_shape=jax.ShapeDtypeStruct((N, Cout, HW), x_nchw.dtype),
        grid_spec=pltpu.PrefetchScalarGridSpec(
            num_scalar_prefetch=0,
            grid=(N,),
            in_specs=[
                pl.BlockSpec((1, Cin, HW), lambda n: (n, 0, 0)),
                pl.BlockSpec((Cout, KH * KW * Cin), lambda n: (0, 0)),
                pl.BlockSpec((3, Cout, 1), lambda n: (0, 0, 0)),
            ],
            out_specs=pl.BlockSpec((1, Cout, HW), lambda n: (n, 0, 0)),
            scratch_shapes=[
                pltpu.VMEM((Cin, HW + 2 * L), jnp.float32),
                pltpu.VMEM((KH * KW * Cin, HW), jnp.float32),
            ],
        ),
        compiler_params=pltpu.CompilerParams(
            dimension_semantics=("parallel",)),
    )(x_flat, w2, params)

    return out_flat.reshape(N, Cout, H, W)


def reference(x_nchw, w_hwio, bias, gamma, beta, *, padding=1):
    """Plain-JAX reference mirroring PyTorch Conv2d + InstanceNorm2d(affine) + ReLU."""
    w_oihw = jnp.transpose(w_hwio, (3, 2, 0, 1))
    out = jax.lax.conv_general_dilated(
        x_nchw, w_oihw, window_strides=(1, 1),
        padding=[(padding, padding), (padding, padding)],
        dimension_numbers=("NCHW", "OIHW", "NCHW"))
    out = out + bias[None, :, None, None]
    mean = jnp.mean(out, axis=(2, 3), keepdims=True)
    var = jnp.mean((out - mean) ** 2, axis=(2, 3), keepdims=True)
    out = (out - mean) * jax.lax.rsqrt(var + 1e-5)
    out = out * gamma[None, :, None, None] + beta[None, :, None, None]
    return jnp.maximum(out, 0.0)


if __name__ == "__main__":
    # SameBlock2d(in_dim=4, out_dim=8, kernel_size=3, padding=1)
    N, Cin, H, W = 2, 4, 16, 16
    Cout, KH, KW = 8, 3, 3

    key = jax.random.PRNGKey(0)
    kx, kw, kb, kg, kbe = jax.random.split(key, 5)

    x = jax.random.normal(kx, (N, Cin, H, W), jnp.float32)
    # Conv2d init-style bounds (deterministic, synthetic -- not a checkpoint load).
    fan_in = Cin * KH * KW
    bound = 1.0 / (fan_in ** 0.5)
    w_hwio = jax.random.uniform(kw, (KH, KW, Cin, Cout), jnp.float32, -bound, bound)
    bias = jax.random.uniform(kb, (Cout,), jnp.float32, -bound, bound)
    # Non-trivial affine params so the norm's scale/shift path is actually exercised.
    gamma = 1.0 + 0.1 * jax.random.normal(kg, (Cout,), jnp.float32)
    beta = 0.1 * jax.random.normal(kbe, (Cout,), jnp.float32)

    out = same_block2d(x, w_hwio, bias, gamma, beta, padding=1)
    out = jax.block_until_ready(out)

    ref = jax.block_until_ready(reference(x, w_hwio, bias, gamma, beta, padding=1))
    assert out.shape == (N, Cout, H, W)
    assert jnp.allclose(out, ref, rtol=1e-4, atol=1e-4), float(jnp.max(jnp.abs(out - ref)))

    print("KERNEL_OK")
</pallas_src>

<mosaic_0001>
module attributes {stable_mosaic.version = 11 : i64} {
  func.func @same_block_kernel(%arg0: i32, %arg1: memref<1x4x256xf32, #tpu.memory_space<vmem>>, %arg2: memref<8x36xf32, #tpu.memory_space<vmem>>, %arg3: memref<3x8x1xf32, #tpu.memory_space<vmem>>, %arg4: memref<1x8x256xf32, #tpu.memory_space<vmem>>, %arg5: memref<4x290xf32, #tpu.memory_space<vmem>>, %arg6: memref<36x256xf32, #tpu.memory_space<vmem>>) attributes {dimension_semantics = [#tpu.dimension_semantics<parallel>], iteration_bounds = array<i64: 2>, scalar_prefetch = 0 : i64, scratch_operands = 2 : i64, tpu.core_type = #tpu.core_type<tc>, window_params = [{transform_indices = @transform_0, window_bounds = array<i64: 1, 4, 256>}, {pipeline_mode = #tpu.pipeline_mode<synchronous>, transform_indices = @transform_1, window_bounds = array<i64: 8, 36>}, {pipeline_mode = #tpu.pipeline_mode<synchronous>, transform_indices = @transform_2, window_bounds = array<i64: 3, 8, 1>}, {transform_indices = @transform_3, window_bounds = array<i64: 1, 8, 256>}]} {
    %cst = arith.constant 0.000000e+00 : f32
    %0 = vector.broadcast %cst : f32 to vector<4x290xf32>
    %c0 = arith.constant 0 : index
    %c0_0 = arith.constant 0 : index
    %1 = vector.load %arg5[%c0, %c0_0] : memref<4x290xf32, #tpu.memory_space<vmem>>, vector<4x290xf32>
    tpu.vector_store %arg5[%c0, %c0_0], %0 {strides = array<i32>} : memref<4x290xf32, #tpu.memory_space<vmem>>, vector<4x290xf32>,
    %c0_1 = arith.constant 0 : index
    %c0_2 = arith.constant 0 : index
    %c0_3 = arith.constant 0 : index
    %2 = vector.load %arg1[%c0_1, %c0_2, %c0_3] : memref<1x4x256xf32, #tpu.memory_space<vmem>>, vector<1x4x256xf32>
    %3 = vector.shape_cast %2 : vector<1x4x256xf32> to vector<4x256xf32>
    %c0_4 = arith.constant 0 : index
    %c17 = arith.constant 17 : index
    %4 = vector.load %arg5[%c0_4, %c17] : memref<4x290xf32, #tpu.memory_space<vmem>>, vector<4x256xf32>
    tpu.vector_store %arg5[%c0_4, %c17], %3 {strides = array<i32>} : memref<4x290xf32, #tpu.memory_space<vmem>>, vector<4x256xf32>,
    %5 = tpu.iota {dimensions = array<i32: 1>} : vector<4x256xi32>
    %c16_i32 = arith.constant 16 : i32
    %c0_i32 = arith.constant 0 : i32
    %6 = arith.cmpi eq, %c16_i32, %c0_i32 : i32
    %c1_i32 = arith.constant 1 : i32
    %7 = arith.select %6, %c1_i32, %c16_i32 : i32
    %8 = vector.broadcast %7 : i32 to vector<4x256xi32>
    %9 = arith.remsi %5, %8 : vector<4x256xi32>
    %c0_i32_5 = arith.constant 0 : i32
    %10 = vector.broadcast %c0_i32_5 : i32 to vector<4x256xi32>
    %11 = arith.cmpi ne, %9, %10 : vector<4x256xi32>
    %c0_i32_6 = arith.constant 0 : i32
    %12 = vector.broadcast %c0_i32_6 : i32 to vector<4x256xi32>
    %13 = arith.cmpi slt, %9, %12 : vector<4x256xi32>
    %c0_i32_7 = arith.constant 0 : i32
    %14 = arith.cmpi slt, %7, %c0_i32_7 : i32
    %15 = vector.broadcast %14 : i1 to vector<4x256xi1>
    %16 = vector.broadcast %15 : vector<4x256xi1> to vector<4x256xi1>
    %17 = arith.xori %13, %16 : vector<4x256xi1>
    %18 = arith.andi %17, %11 : vector<4x256xi1>
    %19 = vector.broadcast %7 : i32 to vector<4x256xi32>
    %20 = arith.addi %9, %19 : vector<4x256xi32>
    %21 = arith.select %18, %20, %9 : vector<4x256xi1>, vector<4x256xi32>
    %c0_8 = arith.constant 0 : index
    %c0_9 = arith.constant 0 : index
    %22 = vector.load %arg5[%c0_8, %c0_9] : memref<4x290xf32, #tpu.memory_space<vmem>>, vector<4x256xf32>
    %c-1_i32 = arith.constant -1 : i32
    %23 = vector.broadcast %c-1_i32 : i32 to vector<4x256xi32>
    %24 = arith.addi %21, %23 : vector<4x256xi32>
    %c0_i32_10 = arith.constant 0 : i32
    %25 = vector.broadcast %c0_i32_10 : i32 to vector<4x256xi32>
    %26 = arith.cmpi sge, %24, %25 : vector<4x256xi32>
    %c-1_i32_11 = arith.constant -1 : i32
    %27 = vector.broadcast %c-1_i32_11 : i32 to vector<4x256xi32>
    %28 = arith.addi %21, %27 : vector<4x256xi32>
    %c16_i32_12 = arith.constant 16 : i32
    %29 = vector.broadcast %c16_i32_12 : i32 to vector<4x256xi32>
    %30 = arith.cmpi slt, %28, %29 : vector<4x256xi32>
    %31 = arith.andi %26, %30 : vector<4x256xi1>
    %cst_13 = arith.constant 0.000000e+00 : f32
    %32 = vector.broadcast %cst_13 : f32 to vector<4x256xf32>
    %33 = arith.select %31, %22, %32 : vector<4x256xi1>, vector<4x256xf32>
    %c0_14 = arith.constant 0 : index
    %c0_15 = arith.constant 0 : index
    %34 = vector.load %arg6[%c0_14, %c0_15] : memref<36x256xf32, #tpu.memory_space<vmem>>, vector<4x256xf32>
    tpu.vector_store %arg6[%c0_14, %c0_15], %33 {strides = array<i32>} : memref<36x256xf32, #tpu.memory_space<vmem>>, vector<4x256xf32>,
    %c0_16 = arith.constant 0 : index
    %c1 = arith.constant 1 : index
    %35 = vector.load %arg5[%c0_16, %c1] : memref<4x290xf32, #tpu.memory_space<vmem>>, vector<4x256xf32>
    %c4 = arith.constant 4 : index
    %c0_17 = arith.constant 0 : index
    %36 = vector.load %arg6[%c4, %c0_17] : memref<36x256xf32, #tpu.memory_space<vmem>>, vector<4x256xf32>
    tpu.vector_store %arg6[%c4, %c0_17], %35 {strides = array<i32>} : memref<36x256xf32, #tpu.memory_space<vmem>>, vector<4x256xf32>,
    %c0_18 = arith.constant 0 : index
    %c2 = arith.constant 2 : index
    %37 = vector.load %arg5[%c0_18, %c2] : memref<4x290xf32, #tpu.memory_space<vmem>>, vector<4x256xf32>
    %c1_i32_19 = arith.constant 1 : i32
    %38 = vector.broadcast %c1_i32_19 : i32 to vector<4x256xi32>
    %39 = arith.addi %21, %38 : vector<4x256xi32>
    %c0_i32_20 = arith.constant 0 : i32
    %40 = vector.broadcast %c0_i32_20 : i32 to vector<4x256xi32>
    %41 = arith.cmpi sge, %39, %40 : vector<4x256xi32>
    %c1_i32_21 = arith.constant 1 : i32
    %42 = vector.broadcast %c1_i32_21 : i32 to vector<4x256xi32>
    %43 = arith.addi %21, %42 : vector<4x256xi32>
    %c16_i32_22 = arith.constant 16 : i32
    %44 = vector.broadcast %c16_i32_22 : i32 to vector<4x256xi32>
    %45 = arith.cmpi slt, %43, %44 : vector<4x256xi32>
    %46 = arith.andi %41, %45 : vector<4x256xi1>
    %cst_23 = arith.constant 0.000000e+00 : f32
    %47 = vector.broadcast %cst_23 : f32 to vector<4x256xf32>
    %48 = arith.select %46, %37, %47 : vector<4x256xi1>, vector<4x256xf32>
    %c8 = arith.constant 8 : index
    %c0_24 = arith.constant 0 : index
    %49 = vector.load %arg6[%c8, %c0_24] : memref<36x256xf32, #tpu.memory_space<vmem>>, vector<4x256xf32>
    tpu.vector_store %arg6[%c8, %c0_24], %48 {strides = array<i32>} : memref<36x256xf32, #tpu.memory_space<vmem>>, vector<4x256xf32>,
    %c0_25 = arith.constant 0 : index
    %c16 = arith.constant 16 : index
    %50 = vector.load %arg5[%c0_25, %c16] : memref<4x290xf32, #tpu.memory_space<vmem>>, vector<4x256xf32>
    %c-1_i32_26 = arith.constant -1 : i32
    %51 = vector.broadcast %c-1_i32_26 : i32 to vector<4x256xi32>
    %52 = arith.addi %21, %51 : vector<4x256xi32>
    %c0_i32_27 = arith.constant 0 : i32
    %53 = vector.broadcast %c0_i32_27 : i32 to vector<4x256xi32>
    %54 = arith.cmpi sge, %52, %53 : vector<4x256xi32>
    %c-1_i32_28 = arith.constant -1 : i32
    %55 = vector.broadcast %c-1_i32_28 : i32 to vector<4x256xi32>
    %56 = arith.addi %21, %55 : vector<4x256xi32>
    %c16_i32_29 = arith.constant 16 : i32
    %57 = vector.broadcast %c16_i32_29 : i32 to vector<4x256xi32>
    %58 = arith.cmpi slt, %56, %57 : vector<4x256xi32>
    %59 = arith.andi %54, %58 : vector<4x256xi1>
    %cst_30 = arith.constant 0.000000e+00 : f32
    %60 = vector.broadcast %cst_30 : f32 to vector<4x256xf32>
    %61 = arith.select %59, %50, %60 : vector<4x256xi1>, vector<4x256xf32>
    %c12 = arith.constant 12 : index
    %c0_31 = arith.constant 0 : index
    %62 = vector.load %arg6[%c12, %c0_31] : memref<36x256xf32, #tpu.memory_space<vmem>>, vector<4x256xf32>
    tpu.vector_store %arg6[%c12, %c0_31], %61 {strides = array<i32>} : memref<36x256xf32, #tpu.memory_space<vmem>>, vector<4x256xf32>,
    %c0_32 = arith.constant 0 : index
    %c17_33 = arith.constant 17 : index
    %63 = vector.load %arg5[%c0_32, %c17_33] : memref<4x290xf32, #tpu.memory_space<vmem>>, vector<4x256xf32>
    %c16_34 = arith.constant 16 : index
    %c0_35 = arith.constant 0 : index
    %64 = vector.load %arg6[%c16_34, %c0_35] : memref<36x256xf32, #tpu.memory_space<vmem>>, vector<4x256xf32>
    tpu.vector_store %arg6[%c16_34, %c0_35], %63 {strides = array<i32>} : memref<36x256xf32, #tpu.memory_space<vmem>>, vector<4x256xf32>,
    %c0_36 = arith.constant 0 : index
    %c18 = arith.constant 18 : index
    %65 = vector.load %arg5[%c0_36, %c18] : memref<4x290xf32, #tpu.memory_space<vmem>>, vector<4x256xf32>
    %c1_i32_37 = arith.constant 1 : i32
    %66 = vector.broadcast %c1_i32_37 : i32 to vector<4x256xi32>
    %67 = arith.addi %21, %66 : vector<4x256xi32>
    %c0_i32_38 = arith.constant 0 : i32
    %68 = vector.broadcast %c0_i32_38 : i32 to vector<4x256xi32>
    %69 = arith.cmpi sge, %67, %68 : vector<4x256xi32>
    %c1_i32_39 = arith.constant 1 : i32
    %70 = vector.broadcast %c1_i32_39 : i32 to vector<4x256xi32>
    %71 = arith.addi %21, %70 : vector<4x256xi32>
    %c16_i32_40 = arith.constant 16 : i32
    %72 = vector.broadcast %c16_i32_40 : i32 to vector<4x256xi32>
    %73 = arith.cmpi slt, %71, %72 : vector<4x256xi32>
    %74 = arith.andi %69, %73 : vector<4x256xi1>
    %cst_41 = arith.constant 0.000000e+00 : f32
    %75 = vector.broadcast %cst_41 : f32 to vector<4x256xf32>
    %76 = arith.select %74, %65, %75 : vector<4x256xi1>, vector<4x256xf32>
    %c20 = arith.constant 20 : index
    %c0_42 = arith.constant 0 : index
    %77 = vector.load %arg6[%c20, %c0_42] : memref<36x256xf32, #tpu.memory_space<vmem>>, vector<4x256xf32>
    tpu.vector_store %arg6[%c20, %c0_42], %76 {strides = array<i32>} : memref<36x256xf32, #tpu.memory_space<vmem>>, vector<4x256xf32>,
    %c0_43 = arith.constant 0 : index
    %c32 = arith.constant 32 : index
    %78 = vector.load %arg5[%c0_43, %c32] : memref<4x290xf32, #tpu.memory_space<vmem>>, vector<4x256xf32>
    %c-1_i32_44 = arith.constant -1 : i32
    %79 = vector.broadcast %c-1_i32_44 : i32 to vector<4x256xi32>
    %80 = arith.addi %21, %79 : vector<4x256xi32>
    %c0_i32_45 = arith.constant 0 : i32
    %81 = vector.broadcast %c0_i32_45 : i32 to vector<4x256xi32>
    %82 = arith.cmpi sge, %80, %81 : vector<4x256xi32>
    %c-1_i32_46 = arith.constant -1 : i32
    %83 = vector.broadcast %c-1_i32_46 : i32 to vector<4x256xi32>
    %84 = arith.addi %21, %83 : vector<4x256xi32>
    %c16_i32_47 = arith.constant 16 : i32
    %85 = vector.broadcast %c16_i32_47 : i32 to vector<4x256xi32>
    %86 = arith.cmpi slt, %84, %85 : vector<4x256xi32>
    %87 = arith.andi %82, %86 : vector<4x256xi1>
    %cst_48 = arith.constant 0.000000e+00 : f32
    %88 = vector.broadcast %cst_48 : f32 to vector<4x256xf32>
    %89 = arith.select %87, %78, %88 : vector<4x256xi1>, vector<4x256xf32>
    %c24 = arith.constant 24 : index
    %c0_49 = arith.constant 0 : index
    %90 = vector.load %arg6[%c24, %c0_49] : memref<36x256xf32, #tpu.memory_space<vmem>>, vector<4x256xf32>
    tpu.vector_store %arg6[%c24, %c0_49], %89 {strides = array<i32>} : memref<36x256xf32, #tpu.memory_space<vmem>>, vector<4x256xf32>,
    %c0_50 = arith.constant 0 : index
    %c33 = arith.constant 33 : index
    %91 = vector.load %arg5[%c0_50, %c33] : memref<4x290xf32, #tpu.memory_space<vmem>>, vector<4x256xf32>
    %c28 = arith.constant 28 : index
    %c0_51 = arith.constant 0 : index
    %92 = vector.load %arg6[%c28, %c0_51] : memref<36x256xf32, #tpu.memory_space<vmem>>, vector<4x256xf32>
    tpu.vector_store %arg6[%c28, %c0_51], %91 {strides = array<i32>} : memref<36x256xf32, #tpu.memory_space<vmem>>, vector<4x256xf32>,
    %c0_52 = arith.constant 0 : index
    %c34 = arith.constant 34 : index
    %93 = vector.load %arg5[%c0_52, %c34] : memref<4x290xf32, #tpu.memory_space<vmem>>, vector<4x256xf32>
    %c1_i32_53 = arith.constant 1 : i32
    %94 = vector.broadcast %c1_i32_53 : i32 to vector<4x256xi32>
    %95 = arith.addi %21, %94 : vector<4x256xi32>
    %c0_i32_54 = arith.constant 0 : i32
    %96 = vector.broadcast %c0_i32_54 : i32 to vector<4x256xi32>
    %97 = arith.cmpi sge, %95, %96 : vector<4x256xi32>
    %c1_i32_55 = arith.constant 1 : i32
    %98 = vector.broadcast %c1_i32_55 : i32 to vector<4x256xi32>
    %99 = arith.addi %21, %98 : vector<4x256xi32>
    %c16_i32_56 = arith.constant 16 : i32
    %100 = vector.broadcast %c16_i32_56 : i32 to vector<4x256xi32>
    %101 = arith.cmpi slt, %99, %100 : vector<4x256xi32>
    %102 = arith.andi %97, %101 : vector<4x256xi1>
    %cst_57 = arith.constant 0.000000e+00 : f32
    %103 = vector.broadcast %cst_57 : f32 to vector<4x256xf32>
    %104 = arith.select %102, %93, %103 : vector<4x256xi1>, vector<4x256xf32>
    %c32_58 = arith.constant 32 : index
    %c0_59 = arith.constant 0 : index
    %105 = vector.load %arg6[%c32_58, %c0_59] : memref<36x256xf32, #tpu.memory_space<vmem>>, vector<4x256xf32>
    tpu.vector_store %arg6[%c32_58, %c0_59], %104 {strides = array<i32>} : memref<36x256xf32, #tpu.memory_space<vmem>>, vector<4x256xf32>,
    %c0_60 = arith.constant 0 : index
    %c0_61 = arith.constant 0 : index
    %106 = vector.load %arg2[%c0_60, %c0_61] : memref<8x36xf32, #tpu.memory_space<vmem>>, vector<8x36xf32>
    %c0_62 = arith.constant 0 : index
    %c0_63 = arith.constant 0 : index
    %107 = vector.load %arg6[%c0_62, %c0_63] : memref<36x256xf32, #tpu.memory_space<vmem>>, vector<36x256xf32>
    %cst_64 = arith.constant dense<0.000000e+00> : vector<8x256xf32>
    %108 = tpu.matmul %106, %107, %cst_64 {dimension_numbers = #tpu.dot_dimension_numbers<[1], [0], [0], [1], [0, 0, 1, 1], [], []>} : vector<8x36xf32>, vector<36x256xf32>, vector<8x256xf32> -> vector<8x256xf32>
    %c0_65 = arith.constant 0 : index
    %c0_66 = arith.constant 0 : index
    %c0_67 = arith.constant 0 : index
    %109 = vector.load %arg3[%c0_65, %c0_66, %c0_67] : memref<3x8x1xf32, #tpu.memory_space<vmem>>, vector<1x8x1xf32>
    %110 = vector.shape_cast %109 : vector<1x8x1xf32> to vector<8x1xf32>
    %111 = vector.broadcast %110 : vector<8x1xf32> to vector<8x256xf32>
    %112 = arith.addf %108, %111 : vector<8x256xf32>
    %cst_68 = arith.constant dense<0.000000e+00> : vector<8xf32>
    %113 = vector.multi_reduction <add>, %112, %cst_68 [1] : vector<8x256xf32> to vector<8xf32>
    %114 = vector.shape_cast %113 : vector<8xf32> to vector<8x1xf32>
    %cst_69 = arith.constant 3.906250e-03 : f32
    %115 = vector.broadcast %cst_69 : f32 to vector<8x1xf32>
    %116 = arith.mulf %114, %115 : vector<8x1xf32>
    %117 = arith.mulf %112, %112 : vector<8x256xf32>
    %cst_70 = arith.constant dense<0.000000e+00> : vector<8xf32>
    %118 = vector.multi_reduction <add>, %117, %cst_70 [1] : vector<8x256xf32> to vector<8xf32>
    %119 = vector.shape_cast %118 : vector<8xf32> to vector<8x1xf32>
    %cst_71 = arith.constant 3.906250e-03 : f32
    %120 = vector.broadcast %cst_71 : f32 to vector<8x1xf32>
    %121 = arith.mulf %119, %120 : vector<8x1xf32>
    %122 = arith.mulf %116, %116 : vector<8x1xf32>
    %123 = arith.subf %121, %122 : vector<8x1xf32>
    %cst_72 = arith.constant 0.000000e+00 : f32
    %124 = vector.broadcast %cst_72 : f32 to vector<8x1xf32>
    %125 = arith.maximumf %123, %124 : vector<8x1xf32>
    %c1_73 = arith.constant 1 : index
    %c0_74 = arith.constant 0 : index
    %c0_75 = arith.constant 0 : index
    %126 = vector.load %arg3[%c1_73, %c0_74, %c0_75] : memref<3x8x1xf32, #tpu.memory_space<vmem>>, vector<1x8x1xf32>
    %127 = vector.shape_cast %126 : vector<1x8x1xf32> to vector<8x1xf32>
    %cst_76 = arith.constant 9.99999974E-6 : f32
    %128 = vector.broadcast %cst_76 : f32 to vector<8x1xf32>
    %129 = arith.addf %125, %128 : vector<8x1xf32>
    %130 = math.rsqrt %129 : vector<8x1xf32>
    %131 = arith.mulf %127, %130 : vector<8x1xf32>
    %c2_77 = arith.constant 2 : index
    %c0_78 = arith.constant 0 : index
    %c0_79 = arith.constant 0 : index
    %132 = vector.load %arg3[%c2_77, %c0_78, %c0_79] : memref<3x8x1xf32, #tpu.memory_space<vmem>>, vector<1x8x1xf32>
    %133 = vector.shape_cast %132 : vector<1x8x1xf32> to vector<8x1xf32>
    %134 = arith.mulf %116, %131 : vector<8x1xf32>
    %135 = arith.subf %133, %134 : vector<8x1xf32>
    %136 = vector.broadcast %131 : vector<8x1xf32> to vector<8x256xf32>
    %137 = arith.mulf %112, %136 : vector<8x256xf32>
    %138 = vector.broadcast %135 : vector<8x1xf32> to vector<8x256xf32>
    %139 = arith.addf %137, %138 : vector<8x256xf32>
    %cst_80 = arith.constant 0.000000e+00 : f32
    %140 = vector.broadcast %cst_80 : f32 to vector<8x256xf32>
    %141 = arith.maximumf %139, %140 : vector<8x256xf32>
    %c0_81 = arith.constant 0 : index
    %c0_82 = arith.constant 0 : index
    %c0_83 = arith.constant 0 : index
    %142 = vector.load %arg4[%c0_81, %c0_82, %c0_83] : memref<1x8x256xf32, #tpu.memory_space<vmem>>, vector<1x8x256xf32>
    %143 = vector.shape_cast %142 : vector<1x8x256xf32> to vector<8x256xf32>
    %144 = vector.shape_cast %141 : vector<8x256xf32> to vector<1x8x256xf32>
    tpu.vector_store %arg4[%c0_81, %c0_82, %c0_83], %144 {strides = array<i32>} : memref<1x8x256xf32, #tpu.memory_space<vmem>>, vector<1x8x256xf32>,
    return
  }
  func.func @transform_0(%arg0: i32) -> (i32, i32, i32) {
    %c0_i32 = arith.constant 0 : i32
    %c0_i32_0 = arith.constant 0 : i32
    %c0_i32_1 = arith.constant 0 : i32
    return %arg0, %c0_i32, %c0_i32_0 : i32, i32, i32
  }
  func.func @transform_1(%arg0: i32) -> (i32, i32) {
    %c0_i32 = arith.constant 0 : i32
    %c0_i32_0 = arith.constant 0 : i32
    %c0_i32_1 = arith.constant 0 : i32
    return %c0_i32, %c0_i32_0 : i32, i32
  }
  func.func @transform_2(%arg0: i32) -> (i32, i32, i32) {
    %c0_i32 = arith.constant 0 : i32
    %c0_i32_0 = arith.constant 0 : i32
    %c0_i32_1 = arith.constant 0 : i32
    %c0_i32_2 = arith.constant 0 : i32
    return %c0_i32, %c0_i32_0, %c0_i32_1 : i32, i32, i32
  }
  func.func @transform_3(%arg0: i32) -> (i32, i32, i32) {
    %c0_i32 = arith.constant 0 : i32
    %c0_i32_0 = arith.constant 0 : i32
    %c0_i32_1 = arith.constant 0 : i32
    return %arg0, %c0_i32, %c0_i32_0 : i32, i32, i32
  }
}

</mosaic_0001>

<llo_original>
// kernel: tpu_custom_call.1
$region0: #{tpu_custom_call.1}
  #allocation0 [shape = 'u32[]', space=smem, size = 0x4, offset = 0x4, fixed_abs, tag = 'smem constant byte address 0x4 - core index']
  #allocation1 [shape = 'u32[72,128]{1,0:T(1,128)}', space=vmem, size = 0x9000, scoped, tag = 'internal scratch']
  #allocation2 [shape = 'f32[4,290]{1,0:T(4,128)}', space=vmem, size = 0x1800, scoped, tag = 'scratch operand']
  #allocation3 [shape = 'f32[36,256]{1,0:T(8,128)}', space=vmem, size = 0xa000, scoped, tag = 'scratch operand']
  %s0 = inlined_call_operand.vmem [shape: f32[2,4,256], index: 0, kind: input, shape index: {}]
  %s1 = inlined_call_operand.vmem [shape: f32[8,36], index: 1, kind: input, shape index: {}]
  %s2 = inlined_call_operand.vmem [shape: f32[3,8,1], index: 2, kind: input, shape index: {}]
  %s3 = inlined_call_operand.hbm [shape: f32[2,8,256], index: 3, kind: output, shape index: {}]
  %s4 = sld [smem:[#allocation0]]
  $region45: #{tpu_custom_call.1} parent=0
    _
  %s6 = ssub.s32 1, %s4
  %s7 = scalar_select 0, %s6, %s4
  $region1: #{tpu_custom_call.1} parent=0
    #allocation4 [shape = 'u8[16384]{0}', space=vmem, size = 0x4000, scoped, tag = 'output window, operand 0']
    #allocation5 [shape = 's32[2]{0}', space=sflag, size = 0x8, scoped, tag = 'scoped memory for tpu_custom_call.1']
    %8 = vsyncpa [#allocation5], 0
    %s9 = scalar_lea.sflag [#allocation5], 1
    %10 = vsyncpa %s9, 0
    loop: start=0, step=1, limit=4
    $region2: #{tpu_custom_call.1} parent=1 // loop_pre_header
      _
    $region3: #{tpu_custom_call.1} parent=1 // loop_header
      %s12 = sphi 0, %s16
      %p13 = scmp.ge.s32.totalorder %s12, 4
      %s22 = sphi 0, %s24
      %s25 = sphi 0, %s22
      %s26 = sphi 0, %s25
      %s42 = sphi 0, %s26
      %s46 = sphi 0, %s46
      %s48 = sphi 0, %s46
      %s49 = sphi 0, %s48
      %s63 = sphi 0, %s49
      %s67 = sphi 0, %s67
      %s69 = sphi 0, %s67
      %s70 = sphi 0, %s69
      %s84 = sphi 0, %s70
      %s90 = sphi 0, %s92
      %s93 = sphi 0, %s90
      %s94 = sphi 0, %s93
      %s110 = sphi 0, %s94
    $region4: #{tpu_custom_call.1} parent=1 // loop_header_branch
      %15 = sbr.rel (%p13) target = $region8
    $region5: #{tpu_custom_call.1} parent=1 // loop_body
      %s17 = ssub.s32 %s12, 1
      %s18 = ssub.s32 %s12, 2
      %s19 = sadd.s32 %s12, 1
      %s20 = ssub.s32 %s12, %s19
      %p21 = scmp.eq.s32.totalorder %s20, 0
      %s23 = sadd.s32 %s22, 1
      %s24 = scalar_select %p21, %s22, %s23
      %p27 = pneg %p21
      %p28 = scmp.eq.s32.totalorder %s12, 1
      %p29 = por %p27, %p28
      %p30 = scmp.ne.s32.totalorder %s22, %s25
      %p31 = scmp.eq.s32.totalorder %s12, 0
      %p32 = por %p30, %p31
      %p33 = scmp.ne.s32.totalorder %s22, %s25
      %p34 = scmp.eq.s32.totalorder %s17, 1
      %p35 = por %p33, %p34
      %p36 = scmp.ne.s32.totalorder %s25, %s26
      %p37 = scmp.eq.s32.totalorder %s17, 0
      %p38 = por %p36, %p37
      %p39 = scmp.ne.s32.totalorder %s25, %s26
      %p40 = scmp.eq.s32.totalorder %s18, 1
      %p41 = por %p39, %p40
      %p43 = scmp.ne.s32.totalorder %s26, %s42
      %p44 = scmp.eq.s32.totalorder %s18, 0
      %p45 = por %p43, %p44
      %s47 = sadd.s32 %s46, 1
      %p50 = scmp.eq.s32.totalorder %s12, 1
      %p51 = scmp.ne.s32.totalorder %s46, %s48
      %p52 = scmp.eq.s32.totalorder %s12, 0
      %p53 = por %p51, %p52
      %p54 = scmp.ne.s32.totalorder %s46, %s48
      %p55 = scmp.eq.s32.totalorder %s17, 1
      %p56 = por %p54, %p55
      %p57 = scmp.ne.s32.totalorder %s48, %s49
      %p58 = scmp.eq.s32.totalorder %s17, 0
      %p59 = por %p57, %p58
      %p60 = scmp.ne.s32.totalorder %s48, %s49
      %p61 = scmp.eq.s32.totalorder %s18, 1
      %p62 = por %p60, %p61
      %p64 = scmp.ne.s32.totalorder %s49, %s63
      %p65 = scmp.eq.s32.totalorder %s18, 0
      %p66 = por %p64, %p65
      %s68 = sadd.s32 %s67, 1
      %p71 = scmp.eq.s32.totalorder %s12, 1
      %p72 = scmp.ne.s32.totalorder %s67, %s69
      %p73 = scmp.eq.s32.totalorder %s12, 0
      %p74 = por %p72, %p73
      %p75 = scmp.ne.s32.totalorder %s67, %s69
      %p76 = scmp.eq.s32.totalorder %s17, 1
      %p77 = por %p75, %p76
      %p78 = scmp.ne.s32.totalorder %s69, %s70
      %p79 = scmp.eq.s32.totalorder %s17, 0
      %p80 = por %p78, %p79
      %p81 = scmp.ne.s32.totalorder %s69, %s70
      %p82 = scmp.eq.s32.totalorder %s18, 1
      %p83 = por %p81, %p82
      %p85 = scmp.ne.s32.totalorder %s70, %s84
      %p86 = scmp.eq.s32.totalorder %s18, 0
      %p87 = por %p85, %p86
      %s88 = ssub.s32 %s12, %s19
      %p89 = scmp.eq.s32.totalorder %s88, 0
      %s91 = sadd.s32 %s90, 1
      %s92 = scalar_select %p89, %s90, %s91
      %p95 = pneg %p89
      %p96 = scmp.eq.s32.totalorder %s12, 1
      %p97 = por %p95, %p96
      %p98 = scmp.ne.s32.totalorder %s90, %s93
      %p99 = scmp.eq.s32.totalorder %s12, 0
      %p100 = por %p98, %p99
      %p101 = scmp.ne.s32.totalorder %s90, %s93
      %p102 = scmp.eq.s32.totalorder %s17, 1
      %p103 = por %p101, %p102
      %p104 = scmp.ne.s32.totalorder %s93, %s94
      %p105 = scmp.eq.s32.totalorder %s17, 0
      %p106 = por %p104, %p105
      %p107 = scmp.ne.s32.totalorder %s93, %s94
      %p108 = scmp.eq.s32.totalorder %s18, 1
      %p109 = por %p107, %p108
      %p111 = scmp.ne.s32.totalorder %s94, %s110
      %p112 = scmp.eq.s32.totalorder %s18, 0
      %p113 = por %p111, %p112
      %p114 = scmp.le.s32.totalorder 1, %s12
      %p115 = scmp.lt.s32.totalorder %s12, 3
      %p116 = pnand %p114, %p115
      %p117 = pneg %p116
      // Predicated region
      $region9: #{tpu_custom_call.1} parent=5 // pred_check
        _
      $region10: #{tpu_custom_call.1} parent=5 // pred_check_branch
        %119 = sbr.rel (%p116) target = $region12
      $region11: #{tpu_custom_call.1} parent=5 // pred_region
        %s120 = ssub.s32 %s12, 1
        // Predicated region
        $region13: #{tpu_custom_call.1} parent=11 // pred_check
          %p121 = pneg %p59
        $region14: #{tpu_custom_call.1} parent=11 // pred_check_branch
          %123 = sbr.rel (%p121) target = $region16
        $region15: #{tpu_custom_call.1} parent=11 // pred_region
          _
        $region16: #{tpu_custom_call.1} parent=11 // pred_fallthru
          _
        // Predicated region
        $region17: #{tpu_custom_call.1} parent=11 // pred_check
          %p124 = pneg %p80
        $region18: #{tpu_custom_call.1} parent=11 // pred_check_branch
          %126 = sbr.rel (%p124) target = $region20
        $region19: #{tpu_custom_call.1} parent=11 // pred_region
          _
        $region20: #{tpu_custom_call.1} parent=11 // pred_fallthru
          _
      $region12: #{tpu_custom_call.1} parent=5 // pred_fallthru
        _
      %p127 = scmp.lt.s32.totalorder %s12, 2
      // Predicated region
      $region21: #{tpu_custom_call.1} parent=5 // pred_check
        %p128 = pneg %p127
      $region22: #{tpu_custom_call.1} parent=5 // pred_check_branch
        %130 = sbr.rel (%p128) target = $region24
      $region23: #{tpu_custom_call.1} parent=5 // pred_region
        // Predicated region
        $region25: #{tpu_custom_call.1} parent=23 // pred_check
          %p131 = pneg %p32
        $region26: #{tpu_custom_call.1} parent=23 // pred_check_branch
          %133 = sbr.rel (%p131) target = $region28
        $region27: #{tpu_custom_call.1} parent=23 // pred_region
          %p134 = scmp.lt.s32.totalorder %s12, 1
          %s135 = scalar_select %p134, %s12, 1
          %s136 = smul.addr %s135, 2
          %s137 = smul.addr %s136, 4
          %s138 = scalar_lea.vmem %s0, %s137
        $region28: #{tpu_custom_call.1} parent=23 // pred_fallthru
          _
      $region24: #{tpu_custom_call.1} parent=5 // pred_fallthru
        _
      %p139 = scmp.le.s32.totalorder 1, %s12
      %p140 = scmp.lt.s32.totalorder %s12, 3
      %p141 = pnand %p139, %p140
      %p142 = pneg %p141
      // Predicated region
      $region29: #{tpu_custom_call.1} parent=5 // pred_check
        _
      $region30: #{tpu_custom_call.1} parent=5 // pred_check_branch
        %144 = sbr.rel (%p141) target = $region32
      $region31: #{tpu_custom_call.1} parent=5 // pred_region
        %s145 = ssub.s32 %s12, 1
        %p146 = scmp.lt.s32.totalorder %s17, 1
        %s147 = scalar_select %p146, %s17, 1
        %s148 = smul.addr %s147, 2
        %s149 = smul.addr %s148, 4
        %s150 = scalar_lea.vmem %s0, %s149
        %p151 = pneg %p38
        %p152 = pneg %p35
        %p153 = pneg %p59
        %p154 = pneg %p56
        %p155 = pneg %p80
        %p156 = pneg %p77
        %p157 = pneg %p106
        %p158 = pneg %p103
        %s159 = sand.u32 %s93, 1
        %s160 = scalar_lea.sflag [#allocation5], %s159
        %s161 = sand.u32 %s93, 1
        %s162 = smul.addr %s161, 16
        %s163 = scalar_lea.vmem [#allocation4], %s162
        %p164 = scmp.lt.s32.totalorder %s17, 1
        %s165 = scalar_select %p164, %s17, 1
        %s166 = smul.addr %s165, 2
        %s167 = smul.addr %s166, 4
        %s168 = scalar_lea.vmem %s0, %s167
        %169 = vst [vmem:[#allocation2] sm:$0xff] 0.0
        %vm170 = vcmask 273408
        %171 = vst.msk [vmem:[#allocation2 + $0x8] sm:$0xf] %vm170, 0.0
        %v172 = vld [vmem:[%s168] sm:$0xff]
        %174 = vrot.lane.b32.xlu0 %v172, 17
        %v175 = vpop.permute.xlu0 %174
        %v176 = vrot.slane %v175, 4
        %vm177 = vcmask 138240
        %v178 = vsel %vm177, %v176, %v175
        %vm181 = vcmask 1043592
        %vm182 = vcmask 1047556
        %vm183 = vmor %vm182, %vm181
        %184 = vst.msk [vmem:[#allocation2] sm:$0xff] %vm183, %v178
        %vm185 = vcmask 134144
        %186 = vst.msk [vmem:[#allocation2 + $0x8] sm:$0xf] %vm185, %v176
        %v187 = vlaneseq
        %v188 = vand.u32 %v187, 127
        %v189 = vadd.s32 %v188, 128
        %vm190 = vcmp.lt.s32.totalorder %v188, 0
        %v191 = vsub.s32 0, %v188
        %v192 = vsel %vm190, %v191, %v188
        %v193 = vshrl.u32 %v192, 4
        %v194 = vand.u32 %v192, 15
        %v195 = vsub.s32 0, %v194
        %v196 = vsel %vm190, %v195, %v194
        %vm197 = vcmp.lt.s32.totalorder %v189, 0
        %v198 = vsub.s32 0, %v189
        %v199 = vsel %vm197, %v198, %v189
        %v200 = vshrl.u32 %v199, 4
        %v201 = vand.u32 %v199, 15
        %v202 = vsub.s32 0, %v201
        %v203 = vsel %vm197, %v202, %v201
        %vm204 = vcmp.ne.s32.totalorder %v196, 0
        %vm205 = vcmp.ne.s32.totalorder %v203, 0
        %vm206 = vcmp.lt.s32.totalorder %v196, 0
        %vm207 = vcmp.lt.s32.totalorder %v203, 0
        %vm208 = vmand %vm206, %vm204
        %vm209 = vmand %vm207, %vm205
        %v210 = vadd.s32 %v196, 16
        %v211 = vadd.s32 %v203, 16
        %v212 = vsel %vm208, %v210, %v196
        %v213 = vsel %vm209, %v211, %v203
        %v214 = vld [vmem:[#allocation2] sm:$0xff]
        %v215 = vadd.s32 %v212, 4294967295
        %v216 = vadd.s32 %v213, 4294967295
        %vm217 = vcmp.ge.s32.totalorder %v215, 0
        %vm218 = vcmp.ge.s32.totalorder %v216, 0
        %vm219 = vcmp.lt.s32.totalorder %v215, 16
        %vm220 = vcmp.lt.s32.totalorder %v216, 16
        %vm221 = vmand %vm217, %vm219
        %vm222 = vmand %vm218, %vm220
        %224 = vst [vmem:[#allocation1] ss:$2 sm:$0xff] %v214
        %v225 = vld.sshfl [vmem:[#allocation1] sm:$0xff pattern:$0x75316420]
        %v226 = vld.sshfl [vmem:[#allocation1 + $0x8] sm:$0xff pattern:$0x75316420]
        %v229 = vsel %vm221, %v225, 0.0
        %v230 = vsel %vm222, %v226, 0.0
        %231 = vst [vmem:[#allocation3] sm:$0xf] %v229
        %232 = vst [vmem:[#allocation3 + $0x8] sm:$0xf] %v230
        %v233 = vld [vmem:[#allocation2] sm:$0xff]
        %v234 = vld [vmem:[#allocation2 + $0x8] sm:$0xf]
        %s237 = scalar_lea.vmem [#allocation1], 1
        %238 = vst [vmem:[%s237] ss:$2 sm:$0xff] %v233
        %s239 = scalar_lea.vmem [#allocation1], 17
        %240 = vst [vmem:[%s239] ss:$2 sm:$0xff] %v234
        %v241 = vld.sshfl [vmem:[#allocation1] sm:$0xff pattern:$0x75316420]
        %v242 = vld.sshfl [vmem:[#allocation1 + $0x8] sm:$0xff pattern:$0x75316420]
        %v243 = vld.sshfl [vmem:[#allocation1 + $0x10] sm:$0xff pattern:$0x75316420]
        %244 = vrot.lane.b32.xlu0 %v241, 127
        %v245 = vpop.permute.xlu0 %244
        %246 = vrot.lane.b32.xlu0 %v242, 127
        %v247 = vpop.permute.xlu0 %246
        %248 = vrot.lane.b32.xlu0 %v243, 127
        %v249 = vpop.permute.xlu0 %248
        %vm250 = vcmask 1039360
        %v251 = vsel %vm250, %v245, %v247
        %v252 = vsel %vm250, %v247, %v249
        %255 = vst [vmem:[#allocation3] sm:$0xf0] %v251
        %256 = vst [vmem:[#allocation3 + $0x8] sm:$0xf0] %v252
        %v257 = vld [vmem:[#allocation2] sm:$0xff]
        %v258 = vld [vmem:[#allocation2 + $0x8] sm:$0xf]
        %v259 = vadd.s32 %v212, 1
        %v260 = vadd.s32 %v213, 1
        %vm261 = vcmp.ge.s32.totalorder %v259, 0
        %vm262 = vcmp.ge.s32.totalorder %v260, 0
        %vm263 = vcmp.lt.s32.totalorder %v259, 16
        %vm264 = vcmp.lt.s32.totalorder %v260, 16
        %vm265 = vmand %vm261, %vm263
        %vm266 = vmand %vm262, %vm264
        %269 = vst [vmem:[#allocation1] ss:$2 sm:$0xff] %v257
        %s270 = scalar_lea.vmem [#allocation1], 16
        %271 = vst [vmem:[%s270] ss:$2 sm:$0xff] %v258
        %v272 = vld.sshfl [vmem:[#allocation1] sm:$0xff pattern:$0x75316420]
        %v273 = vld.sshfl [vmem:[#allocation1 + $0x8] sm:$0xff pattern:$0x75316420]
        %v274 = vld.sshfl [vmem:[#allocation1 + $0x10] sm:$0xff pattern:$0x75316420]
        %275 = vrot.lane.b32.xlu0 %v272, 126
        %v276 = vpop.permute.xlu0 %275
        %277 = vrot.lane.b32.xlu0 %v273, 126
        %v278 = vpop.permute.xlu0 %277
        %279 = vrot.lane.b32.xlu0 %v274, 126
        %v280 = vpop.permute.xlu0 %279
        %vm281 = vcmask 1031168
        %v282 = vsel %vm281, %v276, %v278
        %v283 = vsel %vm281, %v278, %v280
        %v286 = vsel %vm265, %v282, 0.0
        %v287 = vsel %vm266, %v283, 0.0
        %288 = vst [vmem:[#allocation3 + $0x10] sm:$0xf] %v286
        %289 = vst [vmem:[#allocation3 + $0x18] sm:$0xf] %v287
        %v290 = vld [vmem:[#allocation2] sm:$0xff]
        %v291 = vld [vmem:[#allocation2 + $0x8] sm:$0xf]
        %294 = vst [vmem:[#allocation1] ss:$2 sm:$0xff] %v290
        %s295 = scalar_lea.vmem [#allocation1], 16
        %296 = vst [vmem:[%s295] ss:$2 sm:$0xff] %v291
        %v297 = vld.sshfl [vmem:[#allocation1] sm:$0xff pattern:$0x75316420]
        %v298 = vld.sshfl [vmem:[#allocation1 + $0x8] sm:$0xff pattern:$0x75316420]
        %v299 = vld.sshfl [vmem:[#allocation1 + $0x10] sm:$0xff pattern:$0x75316420]
        %300 = vrot.lane.b32.xlu0 %v297, 112
        %v301 = vpop.permute.xlu0 %300
        %302 = vrot.lane.b32.xlu0 %v298, 112
        %v303 = vpop.permute.xlu0 %302
        %304 = vrot.lane.b32.xlu0 %v299, 112
        %v305 = vpop.permute.xlu0 %304
        %vm306 = vcmask 916480
        %v307 = vsel %vm306, %v301, %v303
        %v308 = vsel %vm306, %v303, %v305
        %v311 = vsel %vm221, %v307, 0.0
        %v312 = vsel %vm222, %v308, 0.0
        %v315 = vrot.slane %v311, 4
        %v316 = vrot.slane %v312, 4
        %319 = vst [vmem:[#allocation3 + $0x10] sm:$0xf0] %v315
        %320 = vst [vmem:[#allocation3 + $0x18] sm:$0xf0] %v316
        %v321 = vld [vmem:[#allocation2] sm:$0xff]
        %v322 = vld [vmem:[#allocation2 + $0x8] sm:$0xf]
        %325 = vst [vmem:[#allocation1] ss:$2 sm:$0xff] %v321
        %s326 = scalar_lea.vmem [#allocation1], 16
        %327 = vst [vmem:[%s326] ss:$2 sm:$0xff] %v322
        %v328 = vld.sshfl [vmem:[#allocation1] sm:$0xff pattern:$0x75316420]
        %v329 = vld.sshfl [vmem:[#allocation1 + $0x8] sm:$0xff pattern:$0x75316420]
        %v330 = vld.sshfl [vmem:[#allocation1 + $0x10] sm:$0xff pattern:$0x75316420]
        %331 = vrot.lane.b32.xlu0 %v328, 111
        %v332 = vpop.permute.xlu0 %331
        %333 = vrot.lane.b32.xlu0 %v329, 111
        %v334 = vpop.permute.xlu0 %333
        %335 = vrot.lane.b32.xlu0 %v330, 111
        %v336 = vpop.permute.xlu0 %335
        %vm337 = vcmask 908288
        %v338 = vsel %vm337, %v332, %v334
        %v339 = vsel %vm337, %v334, %v336
        %342 = vst [vmem:[#allocation3 + $0x20] sm:$0xf] %v338
        %343 = vst [vmem:[#allocation3 + $0x28] sm:$0xf] %v339
        %v344 = vld [vmem:[#allocation2] sm:$0xff]
        %v345 = vld [vmem:[#allocation2 + $0x8] sm:$0xf]
        %348 = vst [vmem:[#allocation1] ss:$2 sm:$0xff] %v344
        %s349 = scalar_lea.vmem [#allocation1], 16
        %350 = vst [vmem:[%s349] ss:$2 sm:$0xff] %v345
        %v351 = vld.sshfl [vmem:[#allocation1] sm:$0xff pattern:$0x75316420]
        %v352 = vld.sshfl [vmem:[#allocation1 + $0x8] sm:$0xff pattern:$0x75316420]
        %v353 = vld.sshfl [vmem:[#allocation1 + $0x10] sm:$0xff pattern:$0x75316420]
        %354 = vrot.lane.b32.xlu0 %v351, 110
        %v355 = vpop.permute.xlu0 %354
        %356 = vrot.lane.b32.xlu0 %v352, 110
        %v357 = vpop.permute.xlu0 %356
        %358 = vrot.lane.b32.xlu0 %v353, 110
        %v359 = vpop.permute.xlu0 %358
        %vm360 = vcmask 900096
        %v361 = vsel %vm360, %v355, %v357
        %v362 = vsel %vm360, %v357, %v359
        %v365 = vsel %vm265, %v361, 0.0
        %v366 = vsel %vm266, %v362, 0.0
        %v369 = vrot.slane %v365, 4
        %v370 = vrot.slane %v366, 4
        %373 = vst [vmem:[#allocation3 + $0x20] sm:$0xf0] %v369
        %374 = vst [vmem:[#allocation3 + $0x28] sm:$0xf0] %v370
        %v375 = vld [vmem:[#allocation2] sm:$0xff]
        %v376 = vld [vmem:[#allocation2 + $0x8] sm:$0xf]
        %379 = vst [vmem:[#allocation1] ss:$2 sm:$0xff] %v375
        %s380 = scalar_lea.vmem [#allocation1], 16
        %381 = vst [vmem:[%s380] ss:$2 sm:$0xff] %v376
        %v382 = vld.sshfl [vmem:[#allocation1] sm:$0xff pattern:$0x75316420]
        %v383 = vld.sshfl [vmem:[#allocation1 + $0x8] sm:$0xff pattern:$0x75316420]
        %v384 = vld.sshfl [vmem:[#allocation1 + $0x10] sm:$0xff pattern:$0x75316420]
        %385 = vrot.lane.b32.xlu0 %v382, 96
        %v386 = vpop.permute.xlu0 %385
        %387 = vrot.lane.b32.xlu0 %v383, 96
        %v388 = vpop.permute.xlu0 %387
        %389 = vrot.lane.b32.xlu0 %v384, 96
        %v390 = vpop.permute.xlu0 %389
        %vm391 = vcmask 785408
        %v392 = vsel %vm391, %v386, %v388
        %v393 = vsel %vm391, %v388, %v390
        %v396 = vsel %vm221, %v392, 0.0
        %v397 = vsel %vm222, %v393, 0.0
        %398 = vst [vmem:[#allocation3 + $0x30] sm:$0xf] %v396
        %399 = vst [vmem:[#allocation3 + $0x38] sm:$0xf] %v397
        %v400 = vld [vmem:[#allocation2] sm:$0xff]
        %v401 = vld [vmem:[#allocation2 + $0x8] sm:$0xf]
        %s404 = scalar_lea.vmem [#allocation1], 1
        %405 = vst [vmem:[%s404] ss:$2 sm:$0xff] %v400
        %s406 = scalar_lea.vmem [#allocation1], 17
        %407 = vst [vmem:[%s406] ss:$2 sm:$0xff] %v401
        %v408 = vld.sshfl [vmem:[#allocation1] sm:$0xff pattern:$0x75316420]
        %v409 = vld.sshfl [vmem:[#allocation1 + $0x8] sm:$0xff pattern:$0x75316420]
        %v410 = vld.sshfl [vmem:[#allocation1 + $0x10] sm:$0xff pattern:$0x75316420]
        %411 = vrot.lane.b32.xlu0 %v408, 95
        %v412 = vpop.permute.xlu0 %411
        %413 = vrot.lane.b32.xlu0 %v409, 95
        %v414 = vpop.permute.xlu0 %413
        %415 = vrot.lane.b32.xlu0 %v410, 95
        %v416 = vpop.permute.xlu0 %415
        %vm417 = vcmask 777216
        %v418 = vsel %vm417, %v412, %v414
        %v419 = vsel %vm417, %v414, %v416
        %422 = vst [vmem:[#allocation3 + $0x30] sm:$0xf0] %v418
        %423 = vst [vmem:[#allocation3 + $0x38] sm:$0xf0] %v419
        %v424 = vld [vmem:[#allocation2] sm:$0xff]
        %v425 = vld [vmem:[#allocation2 + $0x8] sm:$0xf]
        %428 = vst [vmem:[#allocation1] ss:$2 sm:$0xff] %v424
        %s429 = scalar_lea.vmem [#allocation1], 16
        %430 = vst [vmem:[%s429] ss:$2 sm:$0xff] %v425
        %v431 = vld.sshfl [vmem:[#allocation1] sm:$0xff pattern:$0x75316420]
        %v432 = vld.sshfl [vmem:[#allocation1 + $0x8] sm:$0xff pattern:$0x75316420]
        %v433 = vld.sshfl [vmem:[#allocation1 + $0x10] sm:$0xff pattern:$0x75316420]
        %434 = vrot.lane.b32.xlu0 %v431, 94
        %v435 = vpop.permute.xlu0 %434
        %436 = vrot.lane.b32.xlu0 %v432, 94
        %v437 = vpop.permute.xlu0 %436
        %438 = vrot.lane.b32.xlu0 %v433, 94
        %v439 = vpop.permute.xlu0 %438
        %vm440 = vcmask 769024
        %v441 = vsel %vm440, %v435, %v437
        %v442 = vsel %vm440, %v437, %v439
        %v445 = vsel %vm265, %v441, 0.0
        %v446 = vsel %vm266, %v442, 0.0
        %447 = vst [vmem:[#allocation3 + $0x40] sm:$0xf] %v445
        %448 = vst [vmem:[#allocation3 + $0x48] sm:$0xf] %v446
        %v449 = vld [vmem:[%s1] sm:$0xff]
        %v450 = vld [vmem:[#allocation3] sm:$0xff]
        %v451 = vld [vmem:[#allocation3 + $0x8] sm:$0xff]
        %v452 = vld [vmem:[#allocation3 + $0x10] sm:$0xff]
        %v453 = vld [vmem:[#allocation3 + $0x18] sm:$0xff]
        %v454 = vld [vmem:[#allocation3 + $0x20] sm:$0xff]
        %v455 = vld [vmem:[#allocation3 + $0x28] sm:$0xff]
        %v456 = vld [vmem:[#allocation3 + $0x30] sm:$0xff]
        %v457 = vld [vmem:[#allocation3 + $0x38] sm:$0xff]
        %v458 = vld [vmem:[#allocation3 + $0x40] sm:$0xf]
        %v459 = vld [vmem:[#allocation3 + $0x48] sm:$0xf]
        %v460 = vld [vmem:[%s2] sm:$0xff]
        %462 = vset.pattern.permute.xlu0 0
        %463 = vperm.xlu0 %462, %v460
        %v464 = vpop.permute.xlu0 %463
        %vm466 = vcmask 293888
        %v468 = vsel %vm466, %v449, 0
        %vm470 = vcmask 1043456
        %v472 = vsel %vm470, %v458, 0
        %v475 = vsel %vm470, %v459, 0
        %477 = vmatpush.msra.mxu0 0.0
        %478 = vmatpush.msra.mxu0 0.0
        %479 = vmatpush.msra.mxu0 0.0
        %480 = vmatpush.msra.mxu0 0.0
        %481 = vmatpush.msra.mxu0 0.0
        %482 = vmatpush.msra.mxu0 0.0
        %483 = vmatpush.msra.mxu0 0.0
        %484 = vmatpush.msra.mxu0 0.0
        %485 = vmatpush.msra.mxu0 0.0
        %486 = vmatpush.msra.mxu0 0.0
        %487 = vmatpush.msra.mxu0 0.0
        %488 = vmatpush.msra.mxu0 %v472
        %489 = vmatpush.msra.mxu0 %v456
        %490 = vmatpush.msra.mxu0 %v454
        %491 = vmatpush.msra.mxu0 %v452
        %492 = vmatpush.msra.mxu0 %v450
        %493 = vmatmul.f32.gmra.mxu0 %v468
        %v494 = vpop.f32.mrf.mxu0
        %v495 = vadd.f32 %v464, %v494
        %496 = vdwg.mxu0
        %497 = vmatpush.msra.mxu0 0.0
        %498 = vmatpush.msra.mxu0 0.0
        %499 = vmatpush.msra.mxu0 0.0
        %500 = vmatpush.msra.mxu0 0.0
        %501 = vmatpush.msra.mxu0 0.0
        %502 = vmatpush.msra.mxu0 0.0
        %503 = vmatpush.msra.mxu0 0.0
        %504 = vmatpush.msra.mxu0 0.0
        %505 = vmatpush.msra.mxu0 0.0
        %506 = vmatpush.msra.mxu0 0.0
        %507 = vmatpush.msra.mxu0 0.0
        %508 = vmatpush.msra.mxu0 %v475
        %509 = vmatpush.msra.mxu0 %v457
        %510 = vmatpush.msra.mxu0 %v455
        %511 = vmatpush.msra.mxu0 %v453
        %512 = vmatpush.msra.mxu0 %v451
        %513 = vmatmul.f32.gmra.mxu0 %v468
        %v514 = vpop.f32.mrf.mxu0
        %v515 = vadd.f32 %v464, %v514
        %516 = vdwg.mxu0
        %v517 = vadd.f32 %v495, %v515
        %518 = vadd.xlane.f32.xlu0 %v517
        %v519 = vpop.xlane.xlu0 %518
        %v520 = vmul.f32 %v519, 0.00390625
        %v521 = vmul.f32 %v495, %v495
        %v522 = vmul.f32 %v515, %v515
        %v523 = vadd.f32 %v521, %v522
        %524 = vadd.xlane.f32.xlu0 %v523
        %v525 = vpop.xlane.xlu0 %524
        %v526 = vmul.f32 %v525, 0.00390625
        %v527 = vmul.f32 %v520, %v520
        %v528 = vsub.f32 %v526, %v527
        %v529 = vmax.f32 %v528, 0.0
        %s530 = scalar_lea.vmem %s2, 8
        %v531 = vld [vmem:[%s530] sm:$0xff]
        %v532 = vadd.f32 %v529, 1e-05
        %v533 = vrsqrt.pop %v532
        %v534 = vmul.f32 %v533, %v532
        %v535 = vmul.f32 %v534, %v533
        %v536 = vmul.f32 0.5, %v535
        %v537 = vsub.f32 1.5, %v536
        %v538 = vmul.f32 %v533, %v537
        %vm539 = vweird.f32 %v532
        %vm540 = vweird.f32 %v533
        %vm541 = vmor %vm539, %vm540
        %v542 = vsel %vm541, %v533, %v538
        %v543 = vmul.f32 %v531, %v542
        %s544 = scalar_lea.vmem %s2, 16
        %v545 = vld [vmem:[%s544] sm:$0xff]
        %v546 = vmul.f32 %v520, %v543
        %v547 = vsub.f32 %v545, %v546
        %549 = vset.pattern.permute.xlu0 0
        %550 = vperm.xlu0 %549, %v543
        %v551 = vpop.permute.xlu0 %550
        %v553 = vmul.f32 %v495, %v551
        %v554 = vmul.f32 %v515, %v551
        %556 = vset.pattern.permute.xlu0 0
        %557 = vperm.xlu0 %556, %v547
        %v558 = vpop.permute.xlu0 %557
        %v560 = vadd.f32 %v553, %v558
        %v561 = vadd.f32 %v554, %v558
        %v562 = vmax.f32 %v560, 0.0
        %v563 = vmax.f32 %v561, 0.0
        %564 = vst [vmem:[%s163] sm:$0xff] %v562
        %565 = vst [vmem:[%s163 + $0x8] sm:$0xff] %v563
        %s566 = sand.u32 %s93, 1
        %s567 = scalar_lea.sflag [#allocation5], %s566
        %s568 = sand.u32 %s93, 1
        %s569 = smul.addr %s568, 16
        %s570 = scalar_lea.vmem [#allocation4], %s569
        // Predicated region
        $region33: #{tpu_custom_call.1} parent=31 // pred_check
          %p571 = pneg %p103
        $region34: #{tpu_custom_call.1} parent=31 // pred_check_branch
          %573 = sbr.rel (%p571) target = $region36
        $region35: #{tpu_custom_call.1} parent=31 // pred_region
          %575 = vsyncadd %s567, 0
          %s576 = smul.addr %s17, 2
          %s577 = smul.addr %s576, 8
          %s578 = scalar_lea.hbm %s3, %s577
          %s580 = sshll.u32 %s570, 4
          %s581 = int_to_ptr.vmem [resolvable:$true] %s580
          %s582 = sshll.u32 %s578, 4
          %s583 = int_to_ptr.hbm [resolvable:$true] %s582
          %585 = dma.vmem_to_hbm [thread:$0]  %s581, 256, %s583, %s567
        $region36: #{tpu_custom_call.1} parent=31 // pred_fallthru
          _
      $region32: #{tpu_custom_call.1} parent=5 // pred_fallthru
        _
      %p586 = scmp.le.s32.totalorder 2, %s12
      // Predicated region
      $region37: #{tpu_custom_call.1} parent=5 // pred_check
        %p587 = pneg %p586
      $region38: #{tpu_custom_call.1} parent=5 // pred_check_branch
        %589 = sbr.rel (%p587) target = $region40
      $region39: #{tpu_custom_call.1} parent=5 // pred_region
        %s590 = ssub.s32 %s12, 2
        // Predicated region
        $region41: #{tpu_custom_call.1} parent=39 // pred_check
          %p591 = pneg %p109
        $region42: #{tpu_custom_call.1} parent=39 // pred_check_branch
          %593 = sbr.rel (%p591) target = $region44
        $region43: #{tpu_custom_call.1} parent=39 // pred_region
          %s594 = sand.u32 %s94, 1
          %s595 = scalar_lea.sflag [#allocation5], %s594
          %s596 = sand.u32 %s94, 1
          %s597 = smul.addr %s596, 16
          %s598 = scalar_lea.vmem [#allocation4], %s597
          %600 = dma.done %s595, 256
        $region44: #{tpu_custom_call.1} parent=39 // pred_fallthru
          _
      $region40: #{tpu_custom_call.1} parent=5 // pred_fallthru
        _
    $region6: #{tpu_custom_call.1} parent=1 // loop_footer
      %s16 = sadd.s32 1, %s12
    $region7: #{tpu_custom_call.1} parent=1 // loop_footer_branch
      %11 = sbr.rel target = $region3
    $region8: #{tpu_custom_call.1} parent=1 // loop_exit
      _
    %601 = vsyncpa [#allocation5], 1
    %s602 = scalar_lea.sflag [#allocation5], 1
    %603 = vsyncpa %s602, 1

</llo_original>
